<compile_context>
chip_gen: v7x
topology: tpu7x:2x2x1
jax: 0.10.0
libtpu: 0.0.40
codegen_flags: <defaults>
</compile_context>

<pallas_src>
import math
import functools

import jax
import jax.numpy as jnp
from jax.experimental import pallas as pl
from jax.experimental.pallas import tpu as pltpu


def make_positional_encoding(d_model: int, max_len: int) -> jnp.ndarray:
    """Deterministic (max_len, d_model) sinusoidal table, same as the PyTorch __init__."""
    position = jnp.arange(0, max_len, dtype=jnp.float32)[:, None]
    div_term = jnp.exp(
        jnp.arange(0, d_model, 2, dtype=jnp.float32) * -(math.log(10000.0) / d_model)
    )
    pe = jnp.zeros((max_len, d_model), dtype=jnp.float32)
    pe = pe.at[:, 0::2].set(jnp.sin(position * div_term))
    pe = pe.at[:, 1::2].set(jnp.cos(position * div_term))
    return pe


# ---------------- kernels ----------------

def _pe_add_kernel(x_ref, pe_ref, o_ref):
    # x_ref/o_ref: (bB, tR, L); pe_ref: (1, tR, L) broadcast over the batch dim.
    o_ref[...] = x_ref[...] + pe_ref[...]


def _pe_add_dropout_kernel(x_ref, pe_ref, bits_ref, o_ref, *, threshold, scale):
    # Inverted dropout via integer threshold: drop iff bits < round(p * 2^32).
    y = x_ref[...] + pe_ref[...]
    keep = bits_ref[...] >= jnp.uint32(threshold)
    o_ref[...] = jnp.where(keep, y * jnp.asarray(scale, dtype=y.dtype), jnp.zeros_like(y))


# ---------------- tiling plan ----------------

def _plan(B, S, D, itemsize, with_bits):
    """Lane-dense reshape (S, D) -> (R, L), batch block size bB, row-tile size tR."""
    N = S * D
    if N % 128 == 0:
        L, R = 128, N // 128          # lane-dense: last dim exactly 128
    else:
        L, R = D, S                   # fallback: keep full D as the (exempt) last dim

    # x-block byte budget; smaller when a uint32 dropout mask streams alongside so
    # (x + pe + bits + out) * double-buffering stays inside default scoped VMEM.
    budget = (1 if with_bits else 2) * 1024 * 1024
    row_bytes = itemsize * L

    # Fold the whole batch into one block if at least 8 rows per batch still fit.
    bB = B if B * 8 * row_bytes <= budget else 1

    target_rows = max(8, budget // (bB * row_bytes))
    if R <= target_rows:
        tR = R                        # full dim -> exempt from the (8,128) rule
    else:
        tR = max(8, (target_rows // 8) * 8)
    return R, L, bB, tR


# ---------------- wrapper ----------------

def positional_encoding(x, pe, *, p: float = 0.1, training: bool = False, rng_key=None):
    B, S, D = x.shape
    # PyTorch's `x + pe.expand(batch, -1, -1)` only works when seq_len == max_len.
    assert pe.shape == (S, D), "PyTorch forward requires seq_len == max_len"

    dtype = x.dtype
    pe = pe.astype(dtype)  # match activation dtype: halves pe traffic for bf16 inputs

    use_dropout = training and p > 0.0
    if use_dropout and p >= 1.0:
        # Same as PyTorch: everything dropped (avoid 1/(1-p) blow-up).
        return jnp.zeros_like(x)

    R, L, bB, tR = _plan(B, S, D, jnp.dtype(dtype).itemsize, use_dropout)
    x3 = x.reshape(B, R, L)
    pe3 = pe.reshape(1, R, L)

    if bB == B:
        # 1-D grid over row tiles; pe DMA'd once per tile, batch broadcast in VMEM.
        grid = (pl.cdiv(R, tR),)
        x_idx = lambda r: (0, r, 0)
        pe_idx = lambda r: (0, r, 0)
        x_block = (B, tR, L)
        sem = ("parallel",)
    else:
        # Batch innermost so the pe block index is constant across the inner loop.
        grid = (pl.cdiv(R, tR), B)
        x_idx = lambda r, b: (b, r, 0)
        pe_idx = lambda r, b: (0, r, 0)
        x_block = (1, tR, L)
        sem = ("parallel", "parallel")

    x_spec = pl.BlockSpec(x_block, x_idx)
    pe_spec = pl.BlockSpec((1, tR, L), pe_idx)
    out_spec = pl.BlockSpec(x_block, x_idx)
    out_shape = jax.ShapeDtypeStruct((B, R, L), dtype)
    cparams = pltpu.CompilerParams(dimension_semantics=sem)

    if not use_dropout:
        out = pl.pallas_call(
            _pe_add_kernel,
            out_shape=out_shape,
            grid=grid,
            in_specs=[x_spec, pe_spec],
            out_specs=out_spec,
            compiler_params=cparams,
        )(x3, pe3)
    else:
        if rng_key is None:
            rng_key = jax.random.PRNGKey(0)
        # Random bits from XLA (the in-kernel HW PRNG has no CPU/interpret lowering).
        bits = jax.random.bits(rng_key, (B, R, L), dtype=jnp.uint32)
        threshold = min(int(round(p * (2.0 ** 32))), 2 ** 32 - 1)
        scale = 1.0 / (1.0 - p)
        bits_spec = pl.BlockSpec(x_block, x_idx)
        out = pl.pallas_call(
            functools.partial(_pe_add_dropout_kernel, threshold=threshold, scale=scale),
            out_shape=out_shape,
            grid=grid,
            in_specs=[x_spec, pe_spec, bits_spec],
            out_specs=out_spec,
            compiler_params=cparams,
        )(x3, pe3, bits)

    return out.reshape(B, S, D)


if __name__ == "__main__":
    # Small shapes consistent with the module: d_model=32, max_len == seq_len = 8, batch = 2.
    B, S, D = 2, 8, 32
    key = jax.random.PRNGKey(0)
    kx, kdrop = jax.random.split(key)
    x = jax.random.normal(kx, (B, S, D), dtype=jnp.float32)
    pe = make_positional_encoding(d_model=D, max_len=S)

    # Eval mode (dropout is identity) -- check against a pure-JAX reference.
    out_eval = jax.block_until_ready(positional_encoding(x, pe, training=False))
    ref = x + pe[None, :, :]
    assert jnp.allclose(out_eval, ref, atol=1e-6, rtol=1e-6), "mismatch vs reference"

    # Training mode (exercises the fused add+dropout path).
    out_train = jax.block_until_ready(
        positional_encoding(x, pe, p=0.1, training=True, rng_key=kdrop)
    )
    assert out_train.shape == (B, S, D)
    # Every element must be either dropped (0) or the kept value scaled by 1/(1-p).
    scaled = ref / (1.0 - 0.1)
    ok = jnp.isclose(out_train, 0.0, atol=1e-6) | jnp.isclose(
        out_train, scaled, atol=1e-5, rtol=1e-5
    )
    assert bool(jnp.all(ok)), "dropout output not consistent with mask semantics"

    print("KERNEL_OK")
</pallas_src>

<mosaic_0001>
module attributes {stable_mosaic.version = 11 : i64} {
  func.func @_pe_add_kernel(%arg0: i32, %arg1: memref<2x2x128xf32, #tpu.memory_space<vmem>>, %arg2: memref<1x2x128xf32, #tpu.memory_space<vmem>>, %arg3: memref<2x2x128xf32, #tpu.memory_space<vmem>>) attributes {dimension_semantics = [#tpu.dimension_semantics<parallel>], iteration_bounds = array<i64: 1>, scalar_prefetch = 0 : i64, scratch_operands = 0 : i64, tpu.core_type = #tpu.core_type<tc>, window_params = [{transform_indices = @transform_0, window_bounds = array<i64: 2, 2, 128>}, {transform_indices = @transform_1, window_bounds = array<i64: 1, 2, 128>}, {transform_indices = @transform_2, window_bounds = array<i64: 2, 2, 128>}]} {
    %c0 = arith.constant 0 : index
    %c0_0 = arith.constant 0 : index
    %c0_1 = arith.constant 0 : index
    %0 = vector.load %arg1[%c0, %c0_0, %c0_1] : memref<2x2x128xf32, #tpu.memory_space<vmem>>, vector<2x2x128xf32>
    %c0_2 = arith.constant 0 : index
    %c0_3 = arith.constant 0 : index
    %c0_4 = arith.constant 0 : index
    %1 = vector.load %arg2[%c0_2, %c0_3, %c0_4] : memref<1x2x128xf32, #tpu.memory_space<vmem>>, vector<1x2x128xf32>
    %2 = vector.broadcast %1 : vector<1x2x128xf32> to vector<2x2x128xf32>
    %3 = arith.addf %0, %2 : vector<2x2x128xf32>
    %c0_5 = arith.constant 0 : index
    %c0_6 = arith.constant 0 : index
    %c0_7 = arith.constant 0 : index
    %4 = vector.load %arg3[%c0_5, %c0_6, %c0_7] : memref<2x2x128xf32, #tpu.memory_space<vmem>>, vector<2x2x128xf32>
    tpu.vector_store %arg3[%c0_5, %c0_6, %c0_7], %3 {strides = array<i32>} : memref<2x2x128xf32, #tpu.memory_space<vmem>>, vector<2x2x128xf32>,
    return
  }
  func.func @transform_0(%arg0: i32) -> (i32, i32, i32) {
    %c0_i32 = arith.constant 0 : i32
    %c0_i32_0 = arith.constant 0 : i32
    %c0_i32_1 = arith.constant 0 : i32
    return %c0_i32, %arg0, %c0_i32_0 : i32, i32, i32
  }
  func.func @transform_1(%arg0: i32) -> (i32, i32, i32) {
    %c0_i32 = arith.constant 0 : i32
    %c0_i32_0 = arith.constant 0 : i32
    %c0_i32_1 = arith.constant 0 : i32
    return %c0_i32, %arg0, %c0_i32_0 : i32, i32, i32
  }
  func.func @transform_2(%arg0: i32) -> (i32, i32, i32) {
    %c0_i32 = arith.constant 0 : i32
    %c0_i32_0 = arith.constant 0 : i32
    %c0_i32_1 = arith.constant 0 : i32
    return %c0_i32, %arg0, %c0_i32_0 : i32, i32, i32
  }
}

</mosaic_0001>

<llo_original>
// kernel: tpu_custom_call.1
$region0: #{tpu_custom_call.1}
  #allocation0 [shape = 'u32[]', space=smem, size = 0x4, offset = 0x4, fixed_abs, tag = 'smem constant byte address 0x4 - core index']
  #allocation1 [shape = 'u32[144,128]{1,0:T(1,128)}', space=vmem, size = 0x12000, scoped, tag = 'internal scratch']
  %s0 = inlined_call_operand.hbm [shape: f32[2,2,128], index: 0, kind: input, shape index: {}]
  %s1 = inlined_call_operand.vmem [shape: f32[1,2,128], index: 1, kind: input, shape index: {}]
  %s2 = inlined_call_operand.hbm [shape: f32[2,2,128], index: 2, kind: output, shape index: {}]
  %s3 = sld [smem:[#allocation0]]
  $region22: #{tpu_custom_call.1} parent=0
    _
  %s5 = ssub.s32 1, %s3
  %s6 = scalar_select 0, %s5, %s3
  $region1: #{tpu_custom_call.1} parent=0
    #allocation2 [shape = 'u8[2048]{0}', space=vmem, size = 0x800, scoped, tag = 'input window, operand 0, single buffered']
    #allocation3 [shape = 's32[1]{0}', space=sflag, size = 0x4, scoped, tag = 'scoped memory for tpu_custom_call.1']
    #allocation4 [shape = 's32[1]{0}', space=sflag, size = 0x4, scoped, tag = 'scoped memory for tpu_custom_call.1']
    #allocation5 [shape = 'u8[2048]{0}', space=vmem, size = 0x800, scoped, tag = 'output window, operand 0, single buffered']
    %7 = vsyncpa [#allocation3], 0
    %8 = vsyncpa [#allocation4], 0
    // Predicated region
    $region2: #{tpu_custom_call.1} parent=1 // pred_check
      _
    $region3: #{tpu_custom_call.1} parent=1 // pred_check_branch
      %10 = sbr.rel (0) target = $region5
    $region4: #{tpu_custom_call.1} parent=1 // pred_region
      %s12 = ssub.s32 64, 64
      %13 = vsyncadd [#allocation3], %s12
      %s14 = sshll.u32 [#allocation2], 4
      %s15 = int_to_ptr.vmem [resolvable:$true] %s14
      %20 = dma.hbm_to_vmem [thread:$0]  %s0, 64, %s15, [#allocation3], 32, 32, 2
    $region5: #{tpu_custom_call.1} parent=1 // pred_fallthru
      _
    // Predicated region
    $region6: #{tpu_custom_call.1} parent=1 // pred_check
      _
    $region7: #{tpu_custom_call.1} parent=1 // pred_check_branch
      %22 = sbr.rel (0) target = $region9
    $region8: #{tpu_custom_call.1} parent=1 // pred_region
      _
    $region9: #{tpu_custom_call.1} parent=1 // pred_fallthru
      _
    // Predicated region
    $region10: #{tpu_custom_call.1} parent=1 // pred_check
      _
    $region11: #{tpu_custom_call.1} parent=1 // pred_check_branch
      %24 = sbr.rel (0) target = $region13
    $region12: #{tpu_custom_call.1} parent=1 // pred_region
      %25 = dma.done [#allocation3], 64
    $region13: #{tpu_custom_call.1} parent=1 // pred_fallthru
      _
    %v26 = vld [vmem:[#allocation2] sm:$0x3]
    %v27 = vld [vmem:[#allocation2 + $0x2] sm:$0x3]
    %v28 = vld [vmem:[%s1] sm:$0x3]
    %v29 = vadd.f32 %v26, %v28
    %v30 = vadd.f32 %v27, %v28
    %31 = vst [vmem:[#allocation5] sm:$0x3] %v29
    %32 = vst [vmem:[#allocation5 + $0x2] sm:$0x3] %v30
    // Predicated region
    $region14: #{tpu_custom_call.1} parent=1 // pred_check
      _
    $region15: #{tpu_custom_call.1} parent=1 // pred_check_branch
      %34 = sbr.rel (0) target = $region17
    $region16: #{tpu_custom_call.1} parent=1 // pred_region
      %s36 = ssub.s32 64, 64
      %37 = vsyncadd [#allocation4], %s36
      %s38 = sshll.u32 [#allocation5], 4
      %s39 = int_to_ptr.vmem [resolvable:$true] %s38
      %44 = dma.vmem_to_hbm [thread:$0]  %s39, 64, %s2, [#allocation4], 32, 32, 2
    $region17: #{tpu_custom_call.1} parent=1 // pred_fallthru
      _
    // Predicated region
    $region18: #{tpu_custom_call.1} parent=1 // pred_check
      _
    $region19: #{tpu_custom_call.1} parent=1 // pred_check_branch
      %46 = sbr.rel (0) target = $region21
    $region20: #{tpu_custom_call.1} parent=1 // pred_region
      %47 = dma.done [#allocation4], 64
    $region21: #{tpu_custom_call.1} parent=1 // pred_fallthru
      _
    %48 = vsyncpa [#allocation3], 1
    %49 = vsyncpa [#allocation4], 1

</llo_original>
